<compile_context>
chip_gen: v7x
topology: tpu7x:2x2x1
jax: 0.10.0
libtpu: 0.0.40
codegen_flags: <defaults>
</compile_context>

<pallas_src>
import functools

import jax
import jax.numpy as jnp
from jax.experimental import pallas as pl
from jax.experimental.pallas import tpu as pltpu


VMEM_LIMIT_BYTES = 48 * 1024 * 1024  # safe on v7x (64 MiB physical) and v5e/v6e


# --------------------------------------------------------------------------- #
# tiling helpers
# --------------------------------------------------------------------------- #
def _sublane_align(dtype):
    """Rows per fully-packed sublane group: 8 f32, 16 bf16, 32 int8/fp8."""
    return max(8, 32 // jnp.dtype(dtype).itemsize)


def _pick_tile(dim, target, align):
    """Largest multiple of `align` that divides `dim` and is <= target."""
    assert dim % align == 0, (dim, align)
    t = min(target, dim)
    t = max(align, (t // align) * align)
    while dim % t != 0:
        t -= align
    return t


# --------------------------------------------------------------------------- #
# RMSNorm kernel
# --------------------------------------------------------------------------- #
def _rmsnorm_kernel(x_ref, w_ref, o_ref, *, eps):
    x = x_ref[...].astype(jnp.float32)
    ms = jnp.mean(x * x, axis=-1, keepdims=True)
    y = x * jax.lax.rsqrt(ms + eps)
    o_ref[...] = (y * w_ref[...].astype(jnp.float32)).astype(o_ref.dtype)


def rmsnorm(x2d, weight, *, eps, tile_m_target=512):
    M, D = x2d.shape
    align_m = _sublane_align(x2d.dtype)
    assert M % align_m == 0 and D % 128 == 0
    tile_m = _pick_tile(M, tile_m_target, align_m)
    # v7x has 2 TensorCores: prefer >= 2 parallel grid steps when possible.
    if M // tile_m < 2 and tile_m % (2 * align_m) == 0:
        tile_m //= 2

    return pl.pallas_call(
        functools.partial(_rmsnorm_kernel, eps=eps),
        out_shape=jax.ShapeDtypeStruct((M, D), x2d.dtype),
        grid=(M // tile_m,),
        in_specs=[
            pl.BlockSpec((tile_m, D), lambda i: (i, 0)),
            pl.BlockSpec((1, D), lambda i: (0, 0)),
        ],
        out_specs=pl.BlockSpec((tile_m, D), lambda i: (i, 0)),
        compiler_params=pltpu.CompilerParams(
            dimension_semantics=("parallel",),
            vmem_limit_bytes=VMEM_LIMIT_BYTES,
        ),
    )(x2d, weight.reshape(1, D))


# --------------------------------------------------------------------------- #
# Linear (matmul) kernels: out = x @ w_t (+ residual)
# --------------------------------------------------------------------------- #
def _linear_kernel(x_ref, w_ref, o_ref, acc_ref):
    k = pl.program_id(2)

    @pl.when(k == 0)
    def _():
        acc_ref[...] = jnp.zeros_like(acc_ref)

    acc_ref[...] += jnp.dot(x_ref[...], w_ref[...],
                            preferred_element_type=jnp.float32)

    @pl.when(k == pl.num_programs(2) - 1)
    def _():
        o_ref[...] = acc_ref[...].astype(o_ref.dtype)


def _linear_res_kernel(x_ref, w_ref, r_ref, o_ref, acc_ref):
    k = pl.program_id(2)

    @pl.when(k == 0)
    def _():
        acc_ref[...] = jnp.zeros_like(acc_ref)

    acc_ref[...] += jnp.dot(x_ref[...], w_ref[...],
                            preferred_element_type=jnp.float32)

    @pl.when(k == pl.num_programs(2) - 1)
    def _():
        o_ref[...] = (acc_ref[...] + r_ref[...].astype(jnp.float32)).astype(o_ref.dtype)


def _linear_kernel_1k(x_ref, w_ref, o_ref):
    o_ref[...] = jnp.dot(x_ref[...], w_ref[...],
                         preferred_element_type=jnp.float32).astype(o_ref.dtype)


def _linear_res_kernel_1k(x_ref, w_ref, r_ref, o_ref):
    acc = jnp.dot(x_ref[...], w_ref[...], preferred_element_type=jnp.float32)
    o_ref[...] = (acc + r_ref[...].astype(jnp.float32)).astype(o_ref.dtype)


def _tile_mnk(M, N, K, dtype, tile_m_target, tile_n_target, tile_k_target):
    align_m = _sublane_align(dtype)
    assert M % align_m == 0 and N % 128 == 0 and K % 128 == 0
    tile_m = _pick_tile(M, tile_m_target, align_m)
    tile_n = _pick_tile(N, tile_n_target, 128)
    tile_k = _pick_tile(K, tile_k_target, 128)
    # keep >= 2 parallel grid steps for v7x's two TensorCores when possible
    if (M // tile_m) * (N // tile_n) < 2:
        if tile_n % 256 == 0:
            tile_n //= 2
        elif tile_m % (2 * align_m) == 0:
            tile_m //= 2
    return tile_m, tile_n, tile_k


def linear(x2d, w_t, residual=None, *, out_dtype=None,
           tile_m_target=512, tile_n_target=512, tile_k_target=1024):
    """out = x2d @ w_t (+ residual); w_t is the pre-transposed [K, N] weight."""
    M, K = x2d.shape
    Kw, N = w_t.shape
    assert K == Kw
    out_dtype = out_dtype or x2d.dtype
    tile_m, tile_n, tile_k = _tile_mnk(M, N, K, x2d.dtype,
                                       tile_m_target, tile_n_target, tile_k_target)
    nm, nn, nk = M // tile_m, N // tile_n, K // tile_k

    if nk == 1:
        # single K step: no accumulator scratch, no init/finalize overhead
        grid = (nm, nn)
        x_spec = pl.BlockSpec((tile_m, tile_k), lambda i, j: (i, 0))
        w_spec = pl.BlockSpec((tile_k, tile_n), lambda i, j: (0, j))
        mn_spec = pl.BlockSpec((tile_m, tile_n), lambda i, j: (i, j))
        dims = ("parallel", "parallel")
        scratch = []
        if residual is None:
            kernel, in_specs, operands = _linear_kernel_1k, [x_spec, w_spec], (x2d, w_t)
        else:
            kernel, in_specs, operands = (_linear_res_kernel_1k,
                                          [x_spec, w_spec, mn_spec],
                                          (x2d, w_t, residual))
    else:
        grid = (nm, nn, nk)
        x_spec = pl.BlockSpec((tile_m, tile_k), lambda i, j, k: (i, k))
        w_spec = pl.BlockSpec((tile_k, tile_n), lambda i, j, k: (k, j))
        mn_spec = pl.BlockSpec((tile_m, tile_n), lambda i, j, k: (i, j))
        dims = ("parallel", "parallel", "arbitrary")
        scratch = [pltpu.VMEM((tile_m, tile_n), jnp.float32)]
        if residual is None:
            kernel, in_specs, operands = _linear_kernel, [x_spec, w_spec], (x2d, w_t)
        else:
            kernel, in_specs, operands = (_linear_res_kernel,
                                          [x_spec, w_spec, mn_spec],
                                          (x2d, w_t, residual))

    return pl.pallas_call(
        kernel,
        out_shape=jax.ShapeDtypeStruct((M, N), out_dtype),
        grid_spec=pltpu.PrefetchScalarGridSpec(
            num_scalar_prefetch=0, grid=grid,
            in_specs=in_specs, out_specs=mn_spec, scratch_shapes=scratch),
        compiler_params=pltpu.CompilerParams(
            dimension_semantics=dims, vmem_limit_bytes=VMEM_LIMIT_BYTES),
    )(*operands)


# --------------------------------------------------------------------------- #
# Fused SwiGLU up-projection: silu(x @ w1_t) * (x @ w3_t)
# --------------------------------------------------------------------------- #
def _swiglu_up_kernel(x_ref, w1_ref, w3_ref, o_ref, acc1_ref, acc3_ref):
    k = pl.program_id(2)

    @pl.when(k == 0)
    def _():
        acc1_ref[...] = jnp.zeros_like(acc1_ref)
        acc3_ref[...] = jnp.zeros_like(acc3_ref)

    x = x_ref[...]
    acc1_ref[...] += jnp.dot(x, w1_ref[...], preferred_element_type=jnp.float32)
    acc3_ref[...] += jnp.dot(x, w3_ref[...], preferred_element_type=jnp.float32)

    @pl.when(k == pl.num_programs(2) - 1)
    def _():
        a = acc1_ref[...]
        o_ref[...] = (jax.nn.silu(a) * acc3_ref[...]).astype(o_ref.dtype)


def _swiglu_up_kernel_1k(x_ref, w1_ref, w3_ref, o_ref):
    x = x_ref[...]
    a = jnp.dot(x, w1_ref[...], preferred_element_type=jnp.float32)
    b = jnp.dot(x, w3_ref[...], preferred_element_type=jnp.float32)
    o_ref[...] = (jax.nn.silu(a) * b).astype(o_ref.dtype)


def swiglu_up(x2d, w1_t, w3_t, *, out_dtype=None,
              tile_m_target=512, tile_n_target=512, tile_k_target=1024):
    M, K = x2d.shape
    Kw, N = w1_t.shape
    assert Kw == K and w3_t.shape == (K, N)
    out_dtype = out_dtype or x2d.dtype
    tile_m, tile_n, tile_k = _tile_mnk(M, N, K, x2d.dtype,
                                       tile_m_target, tile_n_target, tile_k_target)
    nm, nn, nk = M // tile_m, N // tile_n, K // tile_k

    if nk == 1:
        grid = (nm, nn)
        x_spec = pl.BlockSpec((tile_m, tile_k), lambda i, j: (i, 0))
        w_spec = pl.BlockSpec((tile_k, tile_n), lambda i, j: (0, j))
        o_spec = pl.BlockSpec((tile_m, tile_n), lambda i, j: (i, j))
        dims = ("parallel", "parallel")
        kernel, scratch = _swiglu_up_kernel_1k, []
    else:
        grid = (nm, nn, nk)
        x_spec = pl.BlockSpec((tile_m, tile_k), lambda i, j, k: (i, k))
        w_spec = pl.BlockSpec((tile_k, tile_n), lambda i, j, k: (k, j))
        o_spec = pl.BlockSpec((tile_m, tile_n), lambda i, j, k: (i, j))
        dims = ("parallel", "parallel", "arbitrary")
        kernel = _swiglu_up_kernel
        scratch = [pltpu.VMEM((tile_m, tile_n), jnp.float32),
                   pltpu.VMEM((tile_m, tile_n), jnp.float32)]

    return pl.pallas_call(
        kernel,
        out_shape=jax.ShapeDtypeStruct((M, N), out_dtype),
        grid_spec=pltpu.PrefetchScalarGridSpec(
            num_scalar_prefetch=0, grid=grid,
            in_specs=[x_spec, w_spec, w_spec], out_specs=o_spec,
            scratch_shapes=scratch),
        compiler_params=pltpu.CompilerParams(
            dimension_semantics=dims, vmem_limit_bytes=VMEM_LIMIT_BYTES),
    )(x2d, w1_t, w3_t)


# --------------------------------------------------------------------------- #
# OmniWeave model (placeholder-forward semantics), Pallas-backed
# --------------------------------------------------------------------------- #
def init_omniweave_params(cfg, key, dtype=jnp.float32):
    """Weights are pre-transposed to [K, N] and stored in the compute dtype ONCE
    (per perf review: no per-call transpose / astype)."""
    D, F = cfg["d_model"], cfg["d_ffn"]
    V, Vi = cfg["vocab_size"], cfg["image_vocab_size"]
    keys = iter(jax.random.split(key, 3 * cfg["num_layers"] + 2))

    def w(k, shape, fan_in):
        return (jax.random.normal(k, shape, jnp.float32) * fan_in ** -0.5).astype(dtype)

    layers = []
    for _ in range(cfg["num_layers"]):
        # norm1 / qkv_proj / out_proj are omitted: in the reference placeholder
        # forward they never affect the output (qkv discarded, out_proj(zeros)==0).
        layers.append({
            "norm2_w": jnp.ones((D,), dtype),
            "w1_t": w(next(keys), (D, F), D),
            "w3_t": w(next(keys), (D, F), D),
            "w2_t": w(next(keys), (F, D), F),
        })
    return {
        "layers": layers,
        "norm_w": jnp.ones((D,), dtype),
        "text_head_t": w(next(keys), (D, V), D),
        "image_head_t": w(next(keys), (D, Vi), D),
    }


def omniweave_forward(params, cfg, *, text_tokens=None, image_inputs=None,
                      audio_inputs=None, image_tokens=None, attention_mask=None,
                      rng_key):
    """Mirrors OmniWeaveModel.forward (placeholder semantics, eval mode)."""
    del image_inputs, audio_inputs, image_tokens, attention_mask
    # Reference builds text/image/audio embeddings and then discards them (the
    # list is never read), so no kernels are emitted for those paths.
    batch_size = text_tokens.shape[0] if text_tokens is not None else 1
    D = cfg["d_model"]
    T = cfg["t_combined"]

    # Placeholder hidden state (reference: torch.randn(B, T_combined, d_model)).
    x = jax.random.normal(rng_key, (batch_size, T, D), dtype=cfg["dtype"])
    M = batch_size * T
    x2d = x.reshape(M, D)

    kv_caches = []
    for layer in params["layers"]:
        # Attention placeholder contributes exactly zeros -> h = x (eval dropout).
        h = x2d
        h_norm = rmsnorm(h, layer["norm2_w"], eps=cfg["norm_eps"])
        up = swiglu_up(h_norm, layer["w1_t"], layer["w3_t"])
        # w2 matmul with the residual add fused into the finalize store.
        x2d = linear(up, layer["w2_t"], residual=h)
        kv_caches.append(None)

    x2d = rmsnorm(x2d, params["norm_w"], eps=cfg["norm_eps"])
    text_logits = linear(x2d, params["text_head_t"])
    image_logits = linear(x2d, params["image_head_t"])

    return {
        "text_logits": text_logits.reshape(batch_size, T, -1),
        "image_logits": image_logits.reshape(batch_size, T, -1),
        "last_hidden_state": x2d.reshape(batch_size, T, D),
        "kv_caches": kv_caches,
    }


# --------------------------------------------------------------------------- #
# pure-JAX reference (same math, f32 HIGHEST precision)
# --------------------------------------------------------------------------- #
def _ref_rmsnorm(x, w, eps):
    xf = x.astype(jnp.float32)
    y = xf * jax.lax.rsqrt(jnp.mean(xf * xf, axis=-1, keepdims=True) + eps)
    return (y * w.astype(jnp.float32)).astype(x.dtype)


def ref_forward(params, x2d, cfg):
    dot = functools.partial(jnp.dot, precision=jax.lax.Precision.HIGHEST)
    h = x2d
    for layer in params["layers"]:
        hn = _ref_rmsnorm(h, layer["norm2_w"], cfg["norm_eps"])
        up = jax.nn.silu(dot(hn, layer["w1_t"])) * dot(hn, layer["w3_t"])
        h = h + dot(up, layer["w2_t"])
    h = _ref_rmsnorm(h, params["norm_w"], cfg["norm_eps"])
    return dot(h, params["text_head_t"]), dot(h, params["image_head_t"]), h


# --------------------------------------------------------------------------- #
if __name__ == "__main__":
    # Scaled-down OmniWeave config (reference: d_model=8192, 96 layers, T=512).
    cfg = dict(d_model=256, num_layers=2, num_heads=4, d_ffn=512,
               vocab_size=512, image_vocab_size=256, norm_eps=1e-5,
               t_combined=128, dtype=jnp.float32)

    key = jax.random.PRNGKey(0)
    k_params, k_hidden, k_tok = jax.random.split(key, 3)

    params = init_omniweave_params(cfg, k_params, dtype=cfg["dtype"])
    B = 2
    text_tokens = jax.random.randint(k_tok, (B, 16), 0, cfg["vocab_size"])

    out = omniweave_forward(params, cfg, text_tokens=text_tokens, rng_key=k_hidden)
    out = jax.block_until_ready(out)

    assert out["text_logits"].shape == (B, cfg["t_combined"], cfg["vocab_size"])
    assert out["image_logits"].shape == (B, cfg["t_combined"], cfg["image_vocab_size"])
    assert out["last_hidden_state"].shape == (B, cfg["t_combined"], cfg["d_model"])
    assert len(out["kv_caches"]) == cfg["num_layers"]
    assert all(c is None for c in out["kv_caches"])

    # numerical check vs pure-JAX reference (same placeholder hidden state)
    x = jax.random.normal(k_hidden, (B, cfg["t_combined"], cfg["d_model"]),
                          dtype=cfg["dtype"])
    ref_text, ref_img, ref_h = ref_forward(params, x.reshape(-1, cfg["d_model"]), cfg)

    def _check(name, got, want, tol=2e-2):
        err = float(jnp.max(jnp.abs(got - want)))
        assert err < tol, f"{name} mismatch: max |err| = {err}"

    M = B * cfg["t_combined"]
    _check("last_hidden_state", out["last_hidden_state"].reshape(M, -1), ref_h)
    _check("text_logits", out["text_logits"].reshape(M, -1), ref_text)
    _check("image_logits", out["image_logits"].reshape(M, -1), ref_img)

    print("KERNEL_OK")
</pallas_src>

<mosaic_0001>
module attributes {stable_mosaic.version = 11 : i64} {
  func.func @_rmsnorm_kernel(%arg0: i32, %arg1: memref<128x256xf32, #tpu.memory_space<vmem>>, %arg2: memref<1x256xf32, #tpu.memory_space<vmem>>, %arg3: memref<128x256xf32, #tpu.memory_space<vmem>>) attributes {dimension_semantics = [#tpu.dimension_semantics<parallel>], iteration_bounds = array<i64: 2>, scalar_prefetch = 0 : i64, scratch_operands = 0 : i64, tpu.core_type = #tpu.core_type<tc>, window_params = [{transform_indices = @transform_0, window_bounds = array<i64: 128, 256>}, {pipeline_mode = #tpu.pipeline_mode<synchronous>, transform_indices = @transform_1, window_bounds = array<i64: 1, 256>}, {transform_indices = @transform_2, window_bounds = array<i64: 128, 256>}]} {
    %c0 = arith.constant 0 : index
    %c0_0 = arith.constant 0 : index
    %0 = vector.load %arg1[%c0, %c0_0] : memref<128x256xf32, #tpu.memory_space<vmem>>, vector<128x256xf32>
    %1 = arith.mulf %0, %0 : vector<128x256xf32>
    %cst = arith.constant dense<0.000000e+00> : vector<128xf32>
    %2 = vector.multi_reduction <add>, %1, %cst [1] : vector<128x256xf32> to vector<128xf32>
    %3 = vector.shape_cast %2 : vector<128xf32> to vector<128x1xf32>
    %cst_1 = arith.constant 2.560000e+02 : f32
    %4 = vector.broadcast %cst_1 : f32 to vector<128x1xf32>
    %5 = arith.divf %3, %4 : vector<128x1xf32>
    %cst_2 = arith.constant 9.99999974E-6 : f32
    %6 = vector.broadcast %cst_2 : f32 to vector<128x1xf32>
    %7 = arith.addf %5, %6 : vector<128x1xf32>
    %8 = math.rsqrt %7 : vector<128x1xf32>
    %9 = vector.broadcast %8 : vector<128x1xf32> to vector<128x256xf32>
    %10 = arith.mulf %0, %9 : vector<128x256xf32>
    %c0_3 = arith.constant 0 : index
    %c0_4 = arith.constant 0 : index
    %11 = vector.load %arg2[%c0_3, %c0_4] : memref<1x256xf32, #tpu.memory_space<vmem>>, vector<1x256xf32>
    %12 = vector.broadcast %11 : vector<1x256xf32> to vector<128x256xf32>
    %13 = arith.mulf %10, %12 : vector<128x256xf32>
    %c0_5 = arith.constant 0 : index
    %c0_6 = arith.constant 0 : index
    %14 = vector.load %arg3[%c0_5, %c0_6] : memref<128x256xf32, #tpu.memory_space<vmem>>, vector<128x256xf32>
    tpu.vector_store %arg3[%c0_5, %c0_6], %13 {strides = array<i32>} : memref<128x256xf32, #tpu.memory_space<vmem>>, vector<128x256xf32>,
    return
  }
  func.func @transform_0(%arg0: i32) -> (i32, i32) {
    %c0_i32 = arith.constant 0 : i32
    %c0_i32_0 = arith.constant 0 : i32
    return %arg0, %c0_i32 : i32, i32
  }
  func.func @transform_1(%arg0: i32) -> (i32, i32) {
    %c0_i32 = arith.constant 0 : i32
    %c0_i32_0 = arith.constant 0 : i32
    %c0_i32_1 = arith.constant 0 : i32
    return %c0_i32, %c0_i32_0 : i32, i32
  }
  func.func @transform_2(%arg0: i32) -> (i32, i32) {
    %c0_i32 = arith.constant 0 : i32
    %c0_i32_0 = arith.constant 0 : i32
    return %arg0, %c0_i32 : i32, i32
  }
}

</mosaic_0001>

<llo_original>
// kernel: tpu_custom_call.1
$region0: #{tpu_custom_call.1}
  #allocation0 [shape = 'u32[]', space=smem, size = 0x4, offset = 0x4, fixed_abs, tag = 'smem constant byte address 0x4 - core index']
  #allocation1 [shape = 'u32[144,128]{1,0:T(1,128)}', space=vmem, size = 0x12000, scoped, tag = 'internal scratch']
  %s0 = inlined_call_operand.hbm [shape: f32[256,256], index: 0, kind: input, shape index: {}]
  %s1 = inlined_call_operand.vmem [shape: f32[1,256], index: 1, kind: input, shape index: {}]
  %s2 = inlined_call_operand.hbm [shape: f32[256,256], index: 2, kind: output, shape index: {}]
  %s3 = sld [smem:[#allocation0]]
  $region45: #{tpu_custom_call.1} parent=0
    _
  %s5 = ssub.s32 1, %s3
  %s6 = scalar_select 0, %s5, %s3
  $region1: #{tpu_custom_call.1} parent=0
    #allocation2 [shape = 'u8[262144]{0}', space=vmem, size = 0x40000, scoped, tag = 'input window, operand 0']
    #allocation3 [shape = 's32[2]{0}', space=sflag, size = 0x8, scoped, tag = 'scoped memory for tpu_custom_call.1']
    #allocation4 [shape = 's32[2]{0}', space=sflag, size = 0x8, scoped, tag = 'scoped memory for tpu_custom_call.1']
    #allocation5 [shape = 'u8[262144]{0}', space=vmem, size = 0x40000, scoped, tag = 'output window, operand 0']
    %7 = vsyncpa [#allocation3], 0
    %s8 = scalar_lea.sflag [#allocation3], 1
    %9 = vsyncpa %s8, 0
    %10 = vsyncpa [#allocation4], 0
    %s11 = scalar_lea.sflag [#allocation4], 1
    %12 = vsyncpa %s11, 0
    loop: start=0, step=1, limit=4
    $region2: #{tpu_custom_call.1} parent=1 // loop_pre_header
      _
    $region3: #{tpu_custom_call.1} parent=1 // loop_header
      %s14 = sphi 0, %s18
      %p15 = scmp.ge.s32.totalorder %s14, 4
      %s24 = sphi 0, %s26
      %s27 = sphi 0, %s24
      %s28 = sphi 0, %s27
      %s44 = sphi 0, %s28
      %s48 = sphi 0, %s48
      %s50 = sphi 0, %s48
      %s51 = sphi 0, %s50
      %s65 = sphi 0, %s51
      %s71 = sphi 0, %s73
      %s74 = sphi 0, %s71
      %s75 = sphi 0, %s74
      %s91 = sphi 0, %s75
    $region4: #{tpu_custom_call.1} parent=1 // loop_header_branch
      %17 = sbr.rel (%p15) target = $region8
    $region5: #{tpu_custom_call.1} parent=1 // loop_body
      %s19 = ssub.s32 %s14, 1
      %s20 = ssub.s32 %s14, 2
      %s21 = sadd.s32 %s14, 1
      %s22 = ssub.s32 %s14, %s21
      %p23 = scmp.eq.s32.totalorder %s22, 0
      %s25 = sadd.s32 %s24, 1
      %s26 = scalar_select %p23, %s24, %s25
      %p29 = pneg %p23
      %p30 = scmp.eq.s32.totalorder %s14, 1
      %p31 = por %p29, %p30
      %p32 = scmp.ne.s32.totalorder %s24, %s27
      %p33 = scmp.eq.s32.totalorder %s14, 0
      %p34 = por %p32, %p33
      %p35 = scmp.ne.s32.totalorder %s24, %s27
      %p36 = scmp.eq.s32.totalorder %s19, 1
      %p37 = por %p35, %p36
      %p38 = scmp.ne.s32.totalorder %s27, %s28
      %p39 = scmp.eq.s32.totalorder %s19, 0
      %p40 = por %p38, %p39
      %p41 = scmp.ne.s32.totalorder %s27, %s28
      %p42 = scmp.eq.s32.totalorder %s20, 1
      %p43 = por %p41, %p42
      %p45 = scmp.ne.s32.totalorder %s28, %s44
      %p46 = scmp.eq.s32.totalorder %s20, 0
      %p47 = por %p45, %p46
      %s49 = sadd.s32 %s48, 1
      %p52 = scmp.eq.s32.totalorder %s14, 1
      %p53 = scmp.ne.s32.totalorder %s48, %s50
      %p54 = scmp.eq.s32.totalorder %s14, 0
      %p55 = por %p53, %p54
      %p56 = scmp.ne.s32.totalorder %s48, %s50
      %p57 = scmp.eq.s32.totalorder %s19, 1
      %p58 = por %p56, %p57
      %p59 = scmp.ne.s32.totalorder %s50, %s51
      %p60 = scmp.eq.s32.totalorder %s19, 0
      %p61 = por %p59, %p60
      %p62 = scmp.ne.s32.totalorder %s50, %s51
      %p63 = scmp.eq.s32.totalorder %s20, 1
      %p64 = por %p62, %p63
      %p66 = scmp.ne.s32.totalorder %s51, %s65
      %p67 = scmp.eq.s32.totalorder %s20, 0
      %p68 = por %p66, %p67
      %s69 = ssub.s32 %s14, %s21
      %p70 = scmp.eq.s32.totalorder %s69, 0
      %s72 = sadd.s32 %s71, 1
      %s73 = scalar_select %p70, %s71, %s72
      %p76 = pneg %p70
      %p77 = scmp.eq.s32.totalorder %s14, 1
      %p78 = por %p76, %p77
      %p79 = scmp.ne.s32.totalorder %s71, %s74
      %p80 = scmp.eq.s32.totalorder %s14, 0
      %p81 = por %p79, %p80
      %p82 = scmp.ne.s32.totalorder %s71, %s74
      %p83 = scmp.eq.s32.totalorder %s19, 1
      %p84 = por %p82, %p83
      %p85 = scmp.ne.s32.totalorder %s74, %s75
      %p86 = scmp.eq.s32.totalorder %s19, 0
      %p87 = por %p85, %p86
      %p88 = scmp.ne.s32.totalorder %s74, %s75
      %p89 = scmp.eq.s32.totalorder %s20, 1
      %p90 = por %p88, %p89
      %p92 = scmp.ne.s32.totalorder %s75, %s91
      %p93 = scmp.eq.s32.totalorder %s20, 0
      %p94 = por %p92, %p93
      %p95 = scmp.le.s32.totalorder 1, %s14
      %p96 = scmp.lt.s32.totalorder %s14, 3
      %p97 = pnand %p95, %p96
      %p98 = pneg %p97
      // Predicated region
      $region9: #{tpu_custom_call.1} parent=5 // pred_check
        _
      $region10: #{tpu_custom_call.1} parent=5 // pred_check_branch
        %100 = sbr.rel (%p97) target = $region12
      $region11: #{tpu_custom_call.1} parent=5 // pred_region
        %s101 = ssub.s32 %s14, 1
        // Predicated region
        $region13: #{tpu_custom_call.1} parent=11 // pred_check
          %p102 = pneg %p61
        $region14: #{tpu_custom_call.1} parent=11 // pred_check_branch
          %104 = sbr.rel (%p102) target = $region16
        $region15: #{tpu_custom_call.1} parent=11 // pred_region
          _
        $region16: #{tpu_custom_call.1} parent=11 // pred_fallthru
          _
      $region12: #{tpu_custom_call.1} parent=5 // pred_fallthru
        _
      %p105 = scmp.lt.s32.totalorder %s14, 2
      // Predicated region
      $region17: #{tpu_custom_call.1} parent=5 // pred_check
        %p106 = pneg %p105
      $region18: #{tpu_custom_call.1} parent=5 // pred_check_branch
        %108 = sbr.rel (%p106) target = $region20
      $region19: #{tpu_custom_call.1} parent=5 // pred_region
        // Predicated region
        $region21: #{tpu_custom_call.1} parent=19 // pred_check
          %p109 = pneg %p34
        $region22: #{tpu_custom_call.1} parent=19 // pred_check_branch
          %111 = sbr.rel (%p109) target = $region24
        $region23: #{tpu_custom_call.1} parent=19 // pred_region
          %s112 = sand.u32 %s24, 1
          %s113 = scalar_lea.sflag [#allocation3], %s112
          %s114 = sand.u32 %s24, 1
          %s115 = smul.addr %s114, 256
          %s116 = scalar_lea.vmem [#allocation2], %s115
          %s117 = smul.u32 16, %s14
          %s119 = ssub.s32 4096, 4096
          %120 = vsyncadd %s113, %s119
          %s121 = smul.addr %s117, 2
          %s122 = smul.addr %s121, 128
          %s123 = scalar_lea.hbm %s0, %s122
          %s124 = sshll.u32 %s116, 4
          %s125 = int_to_ptr.vmem [resolvable:$true] %s124
          %130 = dma.hbm_to_vmem [thread:$0]  %s123, 4096, %s125, %s113, 256, 256, 16
        $region24: #{tpu_custom_call.1} parent=19 // pred_fallthru
          _
      $region20: #{tpu_custom_call.1} parent=5 // pred_fallthru
        _
      %p131 = scmp.le.s32.totalorder 1, %s14
      %p132 = scmp.lt.s32.totalorder %s14, 3
      %p133 = pnand %p131, %p132
      %p134 = pneg %p133
      // Predicated region
      $region25: #{tpu_custom_call.1} parent=5 // pred_check
        _
      $region26: #{tpu_custom_call.1} parent=5 // pred_check_branch
        %136 = sbr.rel (%p133) target = $region28
      $region27: #{tpu_custom_call.1} parent=5 // pred_region
        %s137 = ssub.s32 %s14, 1
        %s138 = sand.u32 %s27, 1
        %s139 = scalar_lea.sflag [#allocation3], %s138
        %s140 = sand.u32 %s27, 1
        %s141 = smul.addr %s140, 256
        %s142 = scalar_lea.vmem [#allocation2], %s141
        // Predicated region
        $region29: #{tpu_custom_call.1} parent=27 // pred_check
          %p143 = pneg %p40
        $region30: #{tpu_custom_call.1} parent=27 // pred_check_branch
          %145 = sbr.rel (%p143) target = $region32
        $region31: #{tpu_custom_call.1} parent=27 // pred_region
          %146 = dma.done %s139, 4096
        $region32: #{tpu_custom_call.1} parent=27 // pred_fallthru
          _
        %s147 = sand.u32 %s27, 1
        %s148 = scalar_lea.sflag [#allocation3], %s147
        %s149 = sand.u32 %s27, 1
        %s150 = smul.addr %s149, 256
        %s151 = scalar_lea.vmem [#allocation2], %s150
        %p152 = pneg %p40
        %p153 = pneg %p37
        %p154 = pneg %p61
        %p155 = pneg %p58
        %p156 = pneg %p87
        %p157 = pneg %p84
        %s158 = sand.u32 %s74, 1
        %s159 = scalar_lea.sflag [#allocation4], %s158
        %s160 = sand.u32 %s74, 1
        %s161 = smul.addr %s160, 256
        %s162 = scalar_lea.vmem [#allocation5], %s161
        %s163 = smul.u32 16, %s19
        %s164 = smul.u32 16, %s19
        %v165 = vld [vmem:[%s142] sm:$0xff]
        %v166 = vld [vmem:[%s142 + $0x8] sm:$0xff]
        %v167 = vld [vmem:[%s142 + $0x10] sm:$0xff]
        %v168 = vld [vmem:[%s142 + $0x18] sm:$0xff]
        %v169 = vld [vmem:[%s142 + $0x20] sm:$0xff]
        %v170 = vld [vmem:[%s142 + $0x28] sm:$0xff]
        %v171 = vld [vmem:[%s142 + $0x30] sm:$0xff]
        %v172 = vld [vmem:[%s142 + $0x38] sm:$0xff]
        %v173 = vld [vmem:[%s142 + $0x40] sm:$0xff]
        %v174 = vld [vmem:[%s142 + $0x48] sm:$0xff]
        %v175 = vld [vmem:[%s142 + $0x50] sm:$0xff]
        %v176 = vld [vmem:[%s142 + $0x58] sm:$0xff]
        %v177 = vld [vmem:[%s142 + $0x60] sm:$0xff]
        %v178 = vld [vmem:[%s142 + $0x68] sm:$0xff]
        %v179 = vld [vmem:[%s142 + $0x70] sm:$0xff]
        %v180 = vld [vmem:[%s142 + $0x78] sm:$0xff]
        %v181 = vld [vmem:[%s142 + $0x80] sm:$0xff]
        %v182 = vld [vmem:[%s142 + $0x88] sm:$0xff]
        %v183 = vld [vmem:[%s142 + $0x90] sm:$0xff]
        %v184 = vld [vmem:[%s142 + $0x98] sm:$0xff]
        %v185 = vld [vmem:[%s142 + $0xa0] sm:$0xff]
        %v186 = vld [vmem:[%s142 + $0xa8] sm:$0xff]
        %v187 = vld [vmem:[%s142 + $0xb0] sm:$0xff]
        %v188 = vld [vmem:[%s142 + $0xb8] sm:$0xff]
        %v189 = vld [vmem:[%s142 + $0xc0] sm:$0xff]
        %v190 = vld [vmem:[%s142 + $0xc8] sm:$0xff]
        %v191 = vld [vmem:[%s142 + $0xd0] sm:$0xff]
        %v192 = vld [vmem:[%s142 + $0xd8] sm:$0xff]
        %v193 = vld [vmem:[%s142 + $0xe0] sm:$0xff]
        %v194 = vld [vmem:[%s142 + $0xe8] sm:$0xff]
        %v195 = vld [vmem:[%s142 + $0xf0] sm:$0xff]
        %v196 = vld [vmem:[%s142 + $0xf8] sm:$0xff]
        %v197 = vmul.f32 %v165, %v165
        %v198 = vmul.f32 %v166, %v166
        %v199 = vmul.f32 %v167, %v167
        %v200 = vmul.f32 %v168, %v168
        %v201 = vmul.f32 %v169, %v169
        %v202 = vmul.f32 %v170, %v170
        %v203 = vmul.f32 %v171, %v171
        %v204 = vmul.f32 %v172, %v172
        %v205 = vmul.f32 %v173, %v173
        %v206 = vmul.f32 %v174, %v174
        %v207 = vmul.f32 %v175, %v175
        %v208 = vmul.f32 %v176, %v176
        %v209 = vmul.f32 %v177, %v177
        %v210 = vmul.f32 %v178, %v178
        %v211 = vmul.f32 %v179, %v179
        %v212 = vmul.f32 %v180, %v180
        %v213 = vmul.f32 %v181, %v181
        %v214 = vmul.f32 %v182, %v182
        %v215 = vmul.f32 %v183, %v183
        %v216 = vmul.f32 %v184, %v184
        %v217 = vmul.f32 %v185, %v185
        %v218 = vmul.f32 %v186, %v186
        %v219 = vmul.f32 %v187, %v187
        %v220 = vmul.f32 %v188, %v188
        %v221 = vmul.f32 %v189, %v189
        %v222 = vmul.f32 %v190, %v190
        %v223 = vmul.f32 %v191, %v191
        %v224 = vmul.f32 %v192, %v192
        %v225 = vmul.f32 %v193, %v193
        %v226 = vmul.f32 %v194, %v194
        %v227 = vmul.f32 %v195, %v195
        %v228 = vmul.f32 %v196, %v196
        %v229 = vadd.f32 %v197, %v198
        %230 = vadd.xlane.f32.xlu0 %v229
        %v231 = vpop.xlane.xlu0 %230
        %v232 = vadd.f32 %v199, %v200
        %233 = vadd.xlane.f32.xlu0 %v232
        %v234 = vpop.xlane.xlu0 %233
        %v235 = vadd.f32 %v201, %v202
        %236 = vadd.xlane.f32.xlu0 %v235
        %v237 = vpop.xlane.xlu0 %236
        %v238 = vadd.f32 %v203, %v204
        %239 = vadd.xlane.f32.xlu0 %v238
        %v240 = vpop.xlane.xlu0 %239
        %v241 = vadd.f32 %v205, %v206
        %242 = vadd.xlane.f32.xlu0 %v241
        %v243 = vpop.xlane.xlu0 %242
        %v244 = vadd.f32 %v207, %v208
        %245 = vadd.xlane.f32.xlu0 %v244
        %v246 = vpop.xlane.xlu0 %245
        %v247 = vadd.f32 %v209, %v210
        %248 = vadd.xlane.f32.xlu0 %v247
        %v249 = vpop.xlane.xlu0 %248
        %v250 = vadd.f32 %v211, %v212
        %251 = vadd.xlane.f32.xlu0 %v250
        %v252 = vpop.xlane.xlu0 %251
        %v253 = vadd.f32 %v213, %v214
        %254 = vadd.xlane.f32.xlu0 %v253
        %v255 = vpop.xlane.xlu0 %254
        %v256 = vadd.f32 %v215, %v216
        %257 = vadd.xlane.f32.xlu0 %v256
        %v258 = vpop.xlane.xlu0 %257
        %v259 = vadd.f32 %v217, %v218
        %260 = vadd.xlane.f32.xlu0 %v259
        %v261 = vpop.xlane.xlu0 %260
        %v262 = vadd.f32 %v219, %v220
        %263 = vadd.xlane.f32.xlu0 %v262
        %v264 = vpop.xlane.xlu0 %263
        %v265 = vadd.f32 %v221, %v222
        %266 = vadd.xlane.f32.xlu0 %v265
        %v267 = vpop.xlane.xlu0 %266
        %v268 = vadd.f32 %v223, %v224
        %269 = vadd.xlane.f32.xlu0 %v268
        %v270 = vpop.xlane.xlu0 %269
        %v271 = vadd.f32 %v225, %v226
        %272 = vadd.xlane.f32.xlu0 %v271
        %v273 = vpop.xlane.xlu0 %272
        %v274 = vadd.f32 %v227, %v228
        %275 = vadd.xlane.f32.xlu0 %v274
        %v276 = vpop.xlane.xlu0 %275
        %v277 = vrcp.pop 256.0
        %v278 = vmul.f32 %v231, %v277
        %v279 = vmul.f32 %v234, %v277
        %v280 = vmul.f32 %v237, %v277
        %v281 = vmul.f32 %v240, %v277
        %v282 = vmul.f32 %v243, %v277
        %v283 = vmul.f32 %v246, %v277
        %v284 = vmul.f32 %v249, %v277
        %v285 = vmul.f32 %v252, %v277
        %v286 = vmul.f32 %v255, %v277
        %v287 = vmul.f32 %v258, %v277
        %v288 = vmul.f32 %v261, %v277
        %v289 = vmul.f32 %v264, %v277
        %v290 = vmul.f32 %v267, %v277
        %v291 = vmul.f32 %v270, %v277
        %v292 = vmul.f32 %v273, %v277
        %v293 = vmul.f32 %v276, %v277
        %v294 = vadd.f32 %v278, 1e-05
        %v295 = vadd.f32 %v279, 1e-05
        %v296 = vadd.f32 %v280, 1e-05
        %v297 = vadd.f32 %v281, 1e-05
        %v298 = vadd.f32 %v282, 1e-05
        %v299 = vadd.f32 %v283, 1e-05
        %v300 = vadd.f32 %v284, 1e-05
        %v301 = vadd.f32 %v285, 1e-05
        %v302 = vadd.f32 %v286, 1e-05
        %v303 = vadd.f32 %v287, 1e-05
        %v304 = vadd.f32 %v288, 1e-05
        %v305 = vadd.f32 %v289, 1e-05
        %v306 = vadd.f32 %v290, 1e-05
        %v307 = vadd.f32 %v291, 1e-05
        %v308 = vadd.f32 %v292, 1e-05
        %v309 = vadd.f32 %v293, 1e-05
        %v310 = vrsqrt.pop %v294
        %v311 = vrsqrt.pop %v295
        %v312 = vrsqrt.pop %v296
        %v313 = vrsqrt.pop %v297
        %v314 = vrsqrt.pop %v298
        %v315 = vrsqrt.pop %v299
        %v316 = vrsqrt.pop %v300
        %v317 = vrsqrt.pop %v301
        %v318 = vrsqrt.pop %v302
        %v319 = vrsqrt.pop %v303
        %v320 = vrsqrt.pop %v304
        %v321 = vrsqrt.pop %v305
        %v322 = vrsqrt.pop %v306
        %v323 = vrsqrt.pop %v307
        %v324 = vrsqrt.pop %v308
        %v325 = vrsqrt.pop %v309
        %v326 = vmul.f32 %v165, %v310
        %v327 = vmul.f32 %v166, %v310
        %v328 = vmul.f32 %v167, %v311
        %v329 = vmul.f32 %v168, %v311
        %v330 = vmul.f32 %v169, %v312
        %v331 = vmul.f32 %v170, %v312
        %v332 = vmul.f32 %v171, %v313
        %v333 = vmul.f32 %v172, %v313
        %v334 = vmul.f32 %v173, %v314
        %v335 = vmul.f32 %v174, %v314
        %v336 = vmul.f32 %v175, %v315
        %v337 = vmul.f32 %v176, %v315
        %v338 = vmul.f32 %v177, %v316
        %v339 = vmul.f32 %v178, %v316
        %v340 = vmul.f32 %v179, %v317
        %v341 = vmul.f32 %v180, %v317
        %v342 = vmul.f32 %v181, %v318
        %v343 = vmul.f32 %v182, %v318
        %v344 = vmul.f32 %v183, %v319
        %v345 = vmul.f32 %v184, %v319
        %v346 = vmul.f32 %v185, %v320
        %v347 = vmul.f32 %v186, %v320
        %v348 = vmul.f32 %v187, %v321
        %v349 = vmul.f32 %v188, %v321
        %v350 = vmul.f32 %v189, %v322
        %v351 = vmul.f32 %v190, %v322
        %v352 = vmul.f32 %v191, %v323
        %v353 = vmul.f32 %v192, %v323
        %v354 = vmul.f32 %v193, %v324
        %v355 = vmul.f32 %v194, %v324
        %v356 = vmul.f32 %v195, %v325
        %v357 = vmul.f32 %v196, %v325
        %v358 = vld [vmem:[%s1] sm:$0x3]
        %v360 = vlaneseq
        %v361 = vshrl.u32 %v360, 7
        %v362 = vsub.s32 0, %v361
        %v363 = vrot.slane %v358, %v362
        %v364 = vlaneseq
        %v365 = vshrl.u32 %v364, 7
        %v366 = vsub.s32 1, %v365
        %v367 = vrot.slane %v358, %v366
        %v370 = vmul.f32 %v326, %v363
        %v371 = vmul.f32 %v327, %v367
        %v372 = vmul.f32 %v328, %v363
        %v373 = vmul.f32 %v329, %v367
        %v374 = vmul.f32 %v330, %v363
        %v375 = vmul.f32 %v331, %v367
        %v376 = vmul.f32 %v332, %v363
        %v377 = vmul.f32 %v333, %v367
        %v378 = vmul.f32 %v334, %v363
        %v379 = vmul.f32 %v335, %v367
        %v380 = vmul.f32 %v336, %v363
        %v381 = vmul.f32 %v337, %v367
        %v382 = vmul.f32 %v338, %v363
        %v383 = vmul.f32 %v339, %v367
        %v384 = vmul.f32 %v340, %v363
        %v385 = vmul.f32 %v341, %v367
        %v386 = vmul.f32 %v342, %v363
        %v387 = vmul.f32 %v343, %v367
        %v388 = vmul.f32 %v344, %v363
        %v389 = vmul.f32 %v345, %v367
        %v390 = vmul.f32 %v346, %v363
        %v391 = vmul.f32 %v347, %v367
        %v392 = vmul.f32 %v348, %v363
        %v393 = vmul.f32 %v349, %v367
        %v394 = vmul.f32 %v350, %v363
        %v395 = vmul.f32 %v351, %v367
        %v396 = vmul.f32 %v352, %v363
        %v397 = vmul.f32 %v353, %v367
        %v398 = vmul.f32 %v354, %v363
        %v399 = vmul.f32 %v355, %v367
        %v400 = vmul.f32 %v356, %v363
        %v401 = vmul.f32 %v357, %v367
        %402 = vst [vmem:[%s162] sm:$0xff] %v370
        %403 = vst [vmem:[%s162 + $0x8] sm:$0xff] %v371
        %404 = vst [vmem:[%s162 + $0x10] sm:$0xff] %v372
        %405 = vst [vmem:[%s162 + $0x18] sm:$0xff] %v373
        %406 = vst [vmem:[%s162 + $0x20] sm:$0xff] %v374
        %407 = vst [vmem:[%s162 + $0x28] sm:$0xff] %v375
        %408 = vst [vmem:[%s162 + $0x30] sm:$0xff] %v376
        %409 = vst [vmem:[%s162 + $0x38] sm:$0xff] %v377
        %410 = vst [vmem:[%s162 + $0x40] sm:$0xff] %v378
        %411 = vst [vmem:[%s162 + $0x48] sm:$0xff] %v379
        %412 = vst [vmem:[%s162 + $0x50] sm:$0xff] %v380
        %413 = vst [vmem:[%s162 + $0x58] sm:$0xff] %v381
        %414 = vst [vmem:[%s162 + $0x60] sm:$0xff] %v382
        %415 = vst [vmem:[%s162 + $0x68] sm:$0xff] %v383
        %416 = vst [vmem:[%s162 + $0x70] sm:$0xff] %v384
        %417 = vst [vmem:[%s162 + $0x78] sm:$0xff] %v385
        %418 = vst [vmem:[%s162 + $0x80] sm:$0xff] %v386
        %419 = vst [vmem:[%s162 + $0x88] sm:$0xff] %v387
        %420 = vst [vmem:[%s162 + $0x90] sm:$0xff] %v388
        %421 = vst [vmem:[%s162 + $0x98] sm:$0xff] %v389
        %422 = vst [vmem:[%s162 + $0xa0] sm:$0xff] %v390
        %423 = vst [vmem:[%s162 + $0xa8] sm:$0xff] %v391
        %424 = vst [vmem:[%s162 + $0xb0] sm:$0xff] %v392
        %425 = vst [vmem:[%s162 + $0xb8] sm:$0xff] %v393
        %426 = vst [vmem:[%s162 + $0xc0] sm:$0xff] %v394
        %427 = vst [vmem:[%s162 + $0xc8] sm:$0xff] %v395
        %428 = vst [vmem:[%s162 + $0xd0] sm:$0xff] %v396
        %429 = vst [vmem:[%s162 + $0xd8] sm:$0xff] %v397
        %430 = vst [vmem:[%s162 + $0xe0] sm:$0xff] %v398
        %431 = vst [vmem:[%s162 + $0xe8] sm:$0xff] %v399
        %432 = vst [vmem:[%s162 + $0xf0] sm:$0xff] %v400
        %433 = vst [vmem:[%s162 + $0xf8] sm:$0xff] %v401
        %s434 = sand.u32 %s74, 1
        %s435 = scalar_lea.sflag [#allocation4], %s434
        %s436 = sand.u32 %s74, 1
        %s437 = smul.addr %s436, 256
        %s438 = scalar_lea.vmem [#allocation5], %s437
        // Predicated region
        $region33: #{tpu_custom_call.1} parent=27 // pred_check
          %p439 = pneg %p84
        $region34: #{tpu_custom_call.1} parent=27 // pred_check_branch
          %441 = sbr.rel (%p439) target = $region36
        $region35: #{tpu_custom_call.1} parent=27 // pred_region
          %s442 = smul.u32 16, %s19
          %s444 = ssub.s32 4096, 4096
          %445 = vsyncadd %s435, %s444
          %s446 = smul.addr %s442, 2
          %s447 = smul.addr %s446, 128
          %s448 = scalar_lea.hbm %s2, %s447
          %s449 = sshll.u32 %s438, 4
          %s450 = int_to_ptr.vmem [resolvable:$true] %s449
          %455 = dma.vmem_to_hbm [thread:$0]  %s450, 4096, %s448, %s435, 256, 256, 16
        $region36: #{tpu_custom_call.1} parent=27 // pred_fallthru
          _
      $region28: #{tpu_custom_call.1} parent=5 // pred_fallthru
        _
      %p456 = scmp.le.s32.totalorder 2, %s14
      // Predicated region
      $region37: #{tpu_custom_call.1} parent=5 // pred_check
        %p457 = pneg %p456
      $region38: #{tpu_custom_call.1} parent=5 // pred_check_branch
        %459 = sbr.rel (%p457) target = $region40
      $region39: #{tpu_custom_call.1} parent=5 // pred_region
        %s460 = ssub.s32 %s14, 2
        // Predicated region
        $region41: #{tpu_custom_call.1} parent=39 // pred_check
          %p461 = pneg %p90
        $region42: #{tpu_custom_call.1} parent=39 // pred_check_branch
          %463 = sbr.rel (%p461) target = $region44
        $region43: #{tpu_custom_call.1} parent=39 // pred_region
          %s464 = sand.u32 %s75, 1
          %s465 = scalar_lea.sflag [#allocation4], %s464
          %s466 = sand.u32 %s75, 1
          %s467 = smul.addr %s466, 256
          %s468 = scalar_lea.vmem [#allocation5], %s467
          %469 = dma.done %s465, 4096
        $region44: #{tpu_custom_call.1} parent=39 // pred_fallthru
          _
      $region40: #{tpu_custom_call.1} parent=5 // pred_fallthru
        _
    $region6: #{tpu_custom_call.1} parent=1 // loop_footer
      %s18 = sadd.s32 1, %s14
    $region7: #{tpu_custom_call.1} parent=1 // loop_footer_branch
      %13 = sbr.rel target = $region3
    $region8: #{tpu_custom_call.1} parent=1 // loop_exit
      _
    %470 = vsyncpa [#allocation3], 1
    %s471 = scalar_lea.sflag [#allocation3], 1
    %472 = vsyncpa %s471, 1
    %473 = vsyncpa [#allocation4], 1
    %s474 = scalar_lea.sflag [#allocation4], 1
    %475 = vsyncpa %s474, 1

</llo_original>
